<compile_context>
chip_gen: v5e
topology: v5e:2x2
jax: 0.10.0
libtpu: 0.0.40
codegen_flags: <defaults>
</compile_context>

<pallas_src>
import functools

import jax
import jax.numpy as jnp
from jax.experimental import pallas as pl
from jax.experimental.pallas import tpu as pltpu


def _focal_loss_kernel(logits_ref, targets_ref, out_ref, *, gamma, n_total, tile_n):
    i = pl.program_id(0)

    x = logits_ref[...].astype(jnp.float32)           # (TN, C)
    t = targets_ref[...]                               # (TN, 1) int32

    # Numerically-stable log-softmax cross entropy per row.
    m = jnp.max(x, axis=-1, keepdims=True)             # (TN, 1)
    lse = jnp.log(jnp.sum(jnp.exp(x - m), axis=-1, keepdims=True)) + m  # (TN, 1)

    # One-hot gather of the target logit (avoids per-row dynamic indexing).
    col = jax.lax.broadcasted_iota(jnp.int32, x.shape, 1)               # (TN, C)
    onehot = (col == t).astype(jnp.float32)                             # (TN, C)
    target_logit = jnp.sum(x * onehot, axis=-1, keepdims=True)          # (TN, 1)

    ce = lse - target_logit                             # (TN, 1)  == CE per row
    pt = jnp.exp(-ce)
    w = 1.0 - pt
    if float(gamma) == 2.0:
        focal = w * w * ce                              # VPU-only, no EUP power
    else:
        focal = jnp.power(w, jnp.float32(gamma)) * ce

    # Mask padded rows (global row index >= n_total contributes 0).
    row = jax.lax.broadcasted_iota(jnp.int32, (tile_n, 1), 0) + i * tile_n
    focal = jnp.where(row < n_total, focal, jnp.float32(0.0))

    # Per-tile partial sum, written into a lane-dense (8, 128) output block
    # (unmasked stores; grid axis stays fully parallel).
    partial = jnp.sum(focal)
    sub = jax.lax.broadcasted_iota(jnp.int32, (8, 128), 0)
    lane = jax.lax.broadcasted_iota(jnp.int32, (8, 128), 1)
    out_ref[...] = jnp.where((sub == 0) & (lane == 0), partial, jnp.float32(0.0))


def focal_loss(logits, targets, *, gamma=2.0, tile_n=None):
    """logits: (N, C) float, targets: (N,) int class indices. Returns scalar f32."""
    n, c = logits.shape

    # Derive tile_n from C: aim for ~2 MiB of f32 logits per block (double
    # buffering -> ~4 MiB VMEM), clamped to [8, round_up(N, 8)].
    if tile_n is None:
        target_bytes = 2 * 1024 * 1024
        tile_n = (target_bytes // (4 * c)) // 8 * 8
    tile_n = max(8, (tile_n // 8) * 8)
    tile_n = min(tile_n, ((n + 7) // 8) * 8)

    # Pad N up to a multiple of tile_n; padded rows are masked in-kernel.
    n_pad = ((n + tile_n - 1) // tile_n) * tile_n
    logits_p = logits
    targets_p = targets.astype(jnp.int32)
    if n_pad != n:
        logits_p = jnp.pad(logits_p, ((0, n_pad - n), (0, 0)))
        targets_p = jnp.pad(targets_p, (0, n_pad - n))
    targets2d = targets_p.reshape(n_pad, 1)
    num_tiles = n_pad // tile_n

    kernel = functools.partial(
        _focal_loss_kernel, gamma=float(gamma), n_total=n, tile_n=tile_n
    )

    partials = pl.pallas_call(
        kernel,
        out_shape=jax.ShapeDtypeStruct((num_tiles * 8, 128), jnp.float32),
        grid_spec=pltpu.PrefetchScalarGridSpec(
            num_scalar_prefetch=0,
            grid=(num_tiles,),
            in_specs=[
                pl.BlockSpec((tile_n, c), lambda i: (i, 0)),
                pl.BlockSpec((tile_n, 1), lambda i: (i, 0)),
            ],
            out_specs=pl.BlockSpec((8, 128), lambda i: (i, 0)),
        ),
        compiler_params=pltpu.CompilerParams(
            dimension_semantics=("parallel",),
            vmem_limit_bytes=32 * 1024 * 1024,
        ),
    )(logits_p, targets2d)

    # Final reduction + mean in the wrapper (single cheap XLA reduce).
    return jnp.sum(partials) / jnp.float32(n)


def _reference_focal_loss(logits, targets, gamma=2.0):
    logp = jax.nn.log_softmax(logits.astype(jnp.float32), axis=-1)
    ce = -jnp.take_along_axis(logp, targets[:, None], axis=-1)[:, 0]
    pt = jnp.exp(-ce)
    return jnp.mean((1.0 - pt) ** gamma * ce)


if __name__ == "__main__":
    key = jax.random.PRNGKey(0)
    k1, k2 = jax.random.split(key)

    N, C = 8, 32  # small (batch, num_classes) consistent with the module
    logits = jax.random.normal(k1, (N, C), dtype=jnp.float32)
    targets = jax.random.randint(k2, (N,), 0, C, dtype=jnp.int32)

    out = focal_loss(logits, targets, gamma=2.0)
    out = jax.block_until_ready(out)

    ref = _reference_focal_loss(logits, targets, gamma=2.0)
    assert jnp.allclose(out, ref, rtol=1e-5, atol=1e-6), (out, ref)

    print("KERNEL_OK")
</pallas_src>

<mosaic_0001>
module attributes {stable_mosaic.version = 11 : i64} {
  func.func @_focal_loss_kernel(%arg0: i32, %arg1: memref<8x32xf32, #tpu.memory_space<vmem>>, %arg2: memref<8x1xi32, #tpu.memory_space<vmem>>, %arg3: memref<8x128xf32, #tpu.memory_space<vmem>>) attributes {dimension_semantics = [#tpu.dimension_semantics<parallel>], iteration_bounds = array<i64: 1>, scalar_prefetch = 0 : i64, scratch_operands = 0 : i64, tpu.core_type = #tpu.core_type<tc>, window_params = [{transform_indices = @transform_0, window_bounds = array<i64: 8, 32>}, {transform_indices = @transform_1, window_bounds = array<i64: 8, 1>}, {transform_indices = @transform_2, window_bounds = array<i64: 8, 128>}]} {
    %c0 = arith.constant 0 : index
    %c0_0 = arith.constant 0 : index
    %0 = vector.load %arg1[%c0, %c0_0] : memref<8x32xf32, #tpu.memory_space<vmem>>, vector<8x32xf32>
    %c0_1 = arith.constant 0 : index
    %c0_2 = arith.constant 0 : index
    %1 = vector.load %arg2[%c0_1, %c0_2] : memref<8x1xi32, #tpu.memory_space<vmem>>, vector<8x1xi32>
    %cst = arith.constant dense<0xFF800000> : vector<8xf32>
    %2 = vector.multi_reduction <maximumf>, %0, %cst [1] : vector<8x32xf32> to vector<8xf32>
    %3 = vector.shape_cast %2 : vector<8xf32> to vector<8x1xf32>
    %4 = vector.broadcast %3 : vector<8x1xf32> to vector<8x32xf32>
    %5 = arith.subf %0, %4 : vector<8x32xf32>
    %6 = math.exp %5 : vector<8x32xf32>
    %cst_3 = arith.constant dense<0.000000e+00> : vector<8xf32>
    %7 = vector.multi_reduction <add>, %6, %cst_3 [1] : vector<8x32xf32> to vector<8xf32>
    %8 = vector.shape_cast %7 : vector<8xf32> to vector<8x1xf32>
    %9 = math.log %8 : vector<8x1xf32>
    %10 = arith.addf %9, %3 : vector<8x1xf32>
    %11 = tpu.iota {dimensions = array<i32: 1>} : vector<8x32xi32>
    %12 = vector.broadcast %1 : vector<8x1xi32> to vector<8x32xi32>
    %13 = arith.cmpi eq, %11, %12 : vector<8x32xi32>
    %14 = arith.extui %13 : vector<8x32xi1> to vector<8x32xi32>
    %15 = arith.sitofp %14 : vector<8x32xi32> to vector<8x32xf32>
    %16 = arith.mulf %0, %15 : vector<8x32xf32>
    %cst_4 = arith.constant dense<0.000000e+00> : vector<8xf32>
    %17 = vector.multi_reduction <add>, %16, %cst_4 [1] : vector<8x32xf32> to vector<8xf32>
    %18 = vector.shape_cast %17 : vector<8xf32> to vector<8x1xf32>
    %19 = arith.subf %10, %18 : vector<8x1xf32>
    %cst_5 = arith.constant 0.000000e+00 : f32
    %20 = vector.broadcast %cst_5 : f32 to vector<8x1xf32>
    %21 = arith.subf %20, %19 : vector<8x1xf32>
    %22 = math.exp %21 : vector<8x1xf32>
    %cst_6 = arith.constant 1.000000e+00 : f32
    %23 = vector.broadcast %cst_6 : f32 to vector<8x1xf32>
    %24 = arith.subf %23, %22 : vector<8x1xf32>
    %25 = arith.mulf %24, %24 : vector<8x1xf32>
    %26 = arith.mulf %25, %19 : vector<8x1xf32>
    %27 = tpu.iota {dimensions = array<i32: 0>} : vector<8x1xi32>
    %c8_i32 = arith.constant 8 : i32
    %28 = arith.muli %arg0, %c8_i32 : i32
    %29 = vector.broadcast %28 : i32 to vector<8x1xi32>
    %30 = arith.addi %27, %29 : vector<8x1xi32>
    %c8_i32_7 = arith.constant 8 : i32
    %31 = vector.broadcast %c8_i32_7 : i32 to vector<8x1xi32>
    %32 = arith.cmpi slt, %30, %31 : vector<8x1xi32>
    %cst_8 = arith.constant 0.000000e+00 : f32
    %33 = vector.broadcast %cst_8 : f32 to vector<8x1xf32>
    %34 = arith.select %32, %26, %33 : vector<8x1xi1>, vector<8x1xf32>
    %35 = vector.shape_cast %34 : vector<8x1xf32> to vector<1x8x1xf32>
    %cst_9 = arith.constant dense<0.000000e+00> : vector<1xf32>
    %36 = vector.multi_reduction <add>, %35, %cst_9 [1, 2] : vector<1x8x1xf32> to vector<1xf32>
    %37 = vector.shape_cast %36 : vector<1xf32> to vector<1x1x1xf32>
    %38 = vector.extract %37[0, 0, 0] : f32 from vector<1x1x1xf32>
    %39 = tpu.iota {dimensions = array<i32: 0>} : vector<8x128xi32>
    %40 = tpu.iota {dimensions = array<i32: 1>} : vector<8x128xi32>
    %c0_i32 = arith.constant 0 : i32
    %41 = vector.broadcast %c0_i32 : i32 to vector<8x128xi32>
    %42 = arith.cmpi eq, %39, %41 : vector<8x128xi32>
    %c0_i32_10 = arith.constant 0 : i32
    %43 = vector.broadcast %c0_i32_10 : i32 to vector<8x128xi32>
    %44 = arith.cmpi eq, %40, %43 : vector<8x128xi32>
    %45 = arith.andi %42, %44 : vector<8x128xi1>
    %cst_11 = arith.constant 0.000000e+00 : f32
    %46 = vector.broadcast %38 : f32 to vector<8x128xf32>
    %47 = vector.broadcast %cst_11 : f32 to vector<8x128xf32>
    %48 = arith.select %45, %46, %47 : vector<8x128xi1>, vector<8x128xf32>
    %c0_12 = arith.constant 0 : index
    %c0_13 = arith.constant 0 : index
    %49 = vector.load %arg3[%c0_12, %c0_13] : memref<8x128xf32, #tpu.memory_space<vmem>>, vector<8x128xf32>
    tpu.vector_store %arg3[%c0_12, %c0_13], %48 {strides = array<i32>} : memref<8x128xf32, #tpu.memory_space<vmem>>, vector<8x128xf32>,
    return
  }
  func.func @transform_0(%arg0: i32) -> (i32, i32) {
    %c0_i32 = arith.constant 0 : i32
    %c0_i32_0 = arith.constant 0 : i32
    return %arg0, %c0_i32 : i32, i32
  }
  func.func @transform_1(%arg0: i32) -> (i32, i32) {
    %c0_i32 = arith.constant 0 : i32
    %c0_i32_0 = arith.constant 0 : i32
    return %arg0, %c0_i32 : i32, i32
  }
  func.func @transform_2(%arg0: i32) -> (i32, i32) {
    %c0_i32 = arith.constant 0 : i32
    %c0_i32_0 = arith.constant 0 : i32
    return %arg0, %c0_i32 : i32, i32
  }
}

</mosaic_0001>

<llo_original>
// kernel: tpu_custom_call.1
$region0: #{tpu_custom_call.1}
  #allocation0 [shape = 'u32[]', space=smem, size = 0x4, offset = 0x4, fixed_abs, tag = 'smem constant byte address 0x4 - core index']
  #allocation1 [shape = 'u32[72,128]{1,0:T(1,128)}', space=vmem, size = 0x9000, scoped, tag = 'internal scratch']
  %s0 = inlined_call_operand.vmem [shape: f32[8,32], index: 0, kind: input, shape index: {}]
  %s1 = inlined_call_operand.vmem [shape: s32[8,1], index: 1, kind: input, shape index: {}]
  %s2 = inlined_call_operand.hbm [shape: f32[8,128], index: 2, kind: output, shape index: {}]
  %s3 = sld [smem:[#allocation0]]
  $region18: #{tpu_custom_call.1} parent=0
    _
  %s5 = ssub.s32 1, %s3
  %s6 = scalar_select 0, %s5, %s3
  $region1: #{tpu_custom_call.1} parent=0
    #allocation2 [shape = 'u8[4096]{0}', space=vmem, size = 0x1000, scoped, tag = 'output window, operand 0, single buffered']
    #allocation3 [shape = 's32[1]{0}', space=sflag, size = 0x4, scoped, tag = 'scoped memory for tpu_custom_call.1']
    %7 = vsyncpa [#allocation3], 0
    // Predicated region
    $region2: #{tpu_custom_call.1} parent=1 // pred_check
      _
    $region3: #{tpu_custom_call.1} parent=1 // pred_check_branch
      %9 = sbr.rel (0) target = $region5
    $region4: #{tpu_custom_call.1} parent=1 // pred_region
      _
    $region5: #{tpu_custom_call.1} parent=1 // pred_fallthru
      _
    // Predicated region
    $region6: #{tpu_custom_call.1} parent=1 // pred_check
      _
    $region7: #{tpu_custom_call.1} parent=1 // pred_check_branch
      %11 = sbr.rel (0) target = $region9
    $region8: #{tpu_custom_call.1} parent=1 // pred_region
      _
    $region9: #{tpu_custom_call.1} parent=1 // pred_fallthru
      _
    %v12 = vld [vmem:[%s0] sm:$0xff]
    %v13 = vld [vmem:[%s1] sm:$0xff]
    %vm14 = vcmask 261120
    %v15 = vsel %vm14, %v12, -inf
    %16 = vmax.xlane.f32.xlu0 %v15
    %v17 = vpop.xlane.xlu0 %16
    %v18 = vsub.f32 %v12, %v17
    %v19 = vmul.f32 %v18, 1.442695
    %v20 = vpow.pop %v19
    %v21 = vsel %vm14, %v20, 0.0
    %22 = vadd.xlane.f32.xlu0 %v21
    %v23 = vpop.xlane.xlu0 %22
    %v24 = vlog2.pop %v23
    %v25 = vmul.f32 %v24, 0.6931472
    %v26 = vadd.f32 %v25, %v17
    %v27 = vlaneseq
    %v28 = vand.u32 %v27, 127
    %29 = vset.pattern.permute.xlu0 0
    %30 = vperm.xlu0 %29, %v13
    %v31 = vpop.permute.xlu0 %30
    %vm32 = vcmp.eq.s32.totalorder %v28, %v31
    %v33 = vsel %vm32, 1, 0
    %v34 = vcvt.s32.f32 %v33
    %v35 = vmul.f32 %v12, %v34
    %v36 = vsel %vm14, %v35, 0.0
    %37 = vadd.xlane.f32.xlu0 %v36
    %v38 = vpop.xlane.xlu0 %37
    %v39 = vsub.f32 %v26, %v38
    %v40 = vsub.f32 0.0, %v39
    %v41 = vmul.f32 %v40, 1.442695
    %v42 = vpow.pop %v41
    %v43 = vsub.f32 1.0, %v42
    %v44 = vmul.f32 %v43, %v43
    %v45 = vmul.f32 %v44, %v39
    %v46 = vlaneseq
    %v47 = vshrl.u32 %v46, 7
    %s48 = smul.u32 0, 8
    %v49 = vstv %s48
    %v50 = vadd.s32 %v47, %v49
    %vm51 = vcmp.lt.s32.totalorder %v50, 8
    %v52 = vsel %vm51, %v45, 0.0
    %vm53 = vcmask 7168
    %v54 = vsel %vm53, %v52, 0.0
    %55 = vadd.xlane.f32.xlu0 %v54
    %v56 = vpop.xlane.xlu0 %55
    %v57 = vrot.slane %v56, 4
    %v58 = vadd.f32 %v56, %v57
    %v59 = vrot.slane %v58, 2
    %v60 = vadd.f32 %v58, %v59
    %v61 = vrot.slane %v60, 1
    %v62 = vadd.f32 %v60, %v61
    %s63 = vtos %v62
    %vm64 = vcmp.eq.s32.totalorder %v47, 0
    %vm65 = vcmp.eq.s32.totalorder %v28, 0
    %vm66 = vmand %vm64, %vm65
    %v67 = vstv %s63
    %v68 = vsel %vm66, %v67, 0.0
    %69 = vst [vmem:[#allocation2] sm:$0xff] %v68
    // Predicated region
    $region10: #{tpu_custom_call.1} parent=1 // pred_check
      _
    $region11: #{tpu_custom_call.1} parent=1 // pred_check_branch
      %71 = sbr.rel (0) target = $region13
    $region12: #{tpu_custom_call.1} parent=1 // pred_region
      %73 = vsyncadd [#allocation3], 0
      %s75 = sshll.u32 [#allocation2], 4
      %s76 = int_to_ptr.vmem [resolvable:$true] %s75
      %s77 = sshll.u32 %s2, 4
      %s78 = int_to_ptr.hbm [resolvable:$true] %s77
      %80 = dma.vmem_to_hbm [thread:$0]  %s76, 128, %s78, [#allocation3]
    $region13: #{tpu_custom_call.1} parent=1 // pred_fallthru
      _
    // Predicated region
    $region14: #{tpu_custom_call.1} parent=1 // pred_check
      _
    $region15: #{tpu_custom_call.1} parent=1 // pred_check_branch
      %82 = sbr.rel (0) target = $region17
    $region16: #{tpu_custom_call.1} parent=1 // pred_region
      %84 = dma.done [#allocation3], 128
    $region17: #{tpu_custom_call.1} parent=1 // pred_fallthru
      _
    %85 = vsyncpa [#allocation3], 1

</llo_original>
